<compile_context>
chip_gen: v6e
topology: v6e:2x2x1
jax: 0.10.0
libtpu: 0.0.40
codegen_flags: <defaults>
</compile_context>

<pallas_src>
import functools

import jax
import jax.numpy as jnp
from jax.experimental import pallas as pl
from jax.experimental.pallas import tpu as pltpu

HIDDEN = 128
LANE = 128
SUBLANE = 8
_MIN_SPLIT_ROWS = 512  # force >=2 grid steps once each tile would have >= this many rows


def _round_up(x, m):
    return ((x + m - 1) // m) * m


def _cdiv(a, b):
    return -(-a // b)


def _dqn_kernel(x_ref, w1_ref, b1_ref, w2_ref, b2_ref, out_ref):
    # Layer 1: [TB, K8] f32 x [K8, 128] f32 on the MXU (K padded to 8 with zeros in wrapper).
    h = (
        jnp.dot(x_ref[...], w1_ref[...], preferred_element_type=jnp.float32)
        + b1_ref[...]
    )
    h = jnp.maximum(h, 0.0)  # ReLU
    # Layer 2: bf16 x bf16 -> f32-accumulated MXU matmul, unpadded (lane-masked) output.
    y = (
        jnp.dot(
            h.astype(jnp.bfloat16),
            w2_ref[...],
            preferred_element_type=jnp.float32,
        )
        + b2_ref[...]
    )
    out_ref[...] = y.astype(out_ref.dtype)


def _choose_batch_tiling(B, block_b):
    """Pick (tb, grid_b, b_pad) with small padding waste and >=2 (even) tiles when feasible."""
    b8 = _round_up(B, SUBLANE)
    n_tiles = max(1, _cdiv(b8, block_b))
    # Keep both v7x TensorCores busy when there is enough work.
    if n_tiles == 1 and b8 >= 2 * _MIN_SPLIT_ROWS:
        n_tiles = 2
    # Even tile count shards evenly across 2 TensorCores; near-free on 1-TC chips.
    if n_tiles > 1 and n_tiles % 2 == 1:
        n_tiles += 1
    tb = _round_up(_cdiv(b8, n_tiles), SUBLANE)
    grid_b = _cdiv(b8, tb)
    b_pad = grid_b * tb
    return tb, grid_b, b_pad


@functools.partial(jax.jit, static_argnames=("block_b",))
def dqn_forward(x, w1, b1, w2, b2, *, block_b=2048):
    """Pallas forward for DQNNetwork.

    x:  [B, num_obs] float32
    w1: [num_obs, 128]  (transposed vs. nn.Linear), b1: [1, 128]
    w2: [128, num_actions] (transposed vs. nn.Linear), b2: [1, num_actions]
    returns [B, num_actions] float32
    """
    B, num_obs = x.shape
    hidden = w1.shape[1]
    num_actions = w2.shape[1]

    # --- pad the tiny contraction dim to a sublane multiple so layer 1 is a clean MXU matmul ---
    k_pad = _round_up(num_obs, SUBLANE)
    if k_pad != num_obs:
        w1p = jnp.zeros((k_pad, hidden), w1.dtype).at[:num_obs, :].set(w1)
    else:
        w1p = w1

    # Layer-2 weights in bf16 (f32 accumulation happens on the MXU).
    w2b = w2.astype(jnp.bfloat16)

    # --- adaptive, sublane-aligned batch tiling ---
    tb, grid_b, b_pad = _choose_batch_tiling(B, block_b)
    if b_pad != B or k_pad != num_obs:
        xp = jnp.zeros((b_pad, k_pad), x.dtype).at[:B, :num_obs].set(x)
    else:
        xp = x

    cost = pl.CostEstimate(
        flops=2 * b_pad * (k_pad * hidden + hidden * num_actions),
        transcendentals=0,
        bytes_accessed=(
            4 * b_pad * k_pad          # x
            + 4 * k_pad * hidden       # w1
            + 4 * hidden               # b1
            + 2 * hidden * num_actions # w2 (bf16)
            + 4 * num_actions          # b2
            + 4 * b_pad * num_actions  # out
        ),
    )

    out = pl.pallas_call(
        _dqn_kernel,
        out_shape=jax.ShapeDtypeStruct((b_pad, num_actions), jnp.float32),
        grid=(grid_b,),
        in_specs=[
            # Batch tile of activations.
            pl.BlockSpec((tb, k_pad), lambda i: (i, 0)),
            # Weights / biases: constant block index -> stay resident in VMEM across the grid.
            pl.BlockSpec((k_pad, hidden), lambda i: (0, 0)),
            pl.BlockSpec((1, hidden), lambda i: (0, 0)),
            pl.BlockSpec((hidden, num_actions), lambda i: (0, 0)),
            pl.BlockSpec((1, num_actions), lambda i: (0, 0)),
        ],
        out_specs=pl.BlockSpec((tb, num_actions), lambda i: (i, 0)),
        compiler_params=pltpu.CompilerParams(
            dimension_semantics=("parallel",),
            vmem_limit_bytes=32 * 1024 * 1024,
        ),
        cost_estimate=cost,
    )(xp, w1p, b1, w2b, b2)

    # Strip batch padding (columns are already exactly num_actions wide).
    return out[:B]


def init_params(key, num_obs, num_actions, hidden=HIDDEN):
    """Deterministic init mimicking PyTorch nn.Linear default (uniform +/- 1/sqrt(fan_in))."""
    k1, k2, k3, k4 = jax.random.split(key, 4)
    bound1 = 1.0 / jnp.sqrt(num_obs)
    bound2 = 1.0 / jnp.sqrt(hidden)
    w1 = jax.random.uniform(k1, (num_obs, hidden), jnp.float32, -bound1, bound1)
    b1 = jax.random.uniform(k2, (1, hidden), jnp.float32, -bound1, bound1)
    w2 = jax.random.uniform(k3, (hidden, num_actions), jnp.float32, -bound2, bound2)
    b2 = jax.random.uniform(k4, (1, num_actions), jnp.float32, -bound2, bound2)
    return w1, b1, w2, b2


def _reference(x, w1, b1, w2, b2):
    # Full-precision f32 reference of the module's forward pass.
    h = jnp.maximum(
        jnp.dot(x, w1, precision=jax.lax.Precision.HIGHEST) + b1, 0.0
    )
    return jnp.dot(h, w2, precision=jax.lax.Precision.HIGHEST) + b2


if __name__ == "__main__":
    key = jax.random.PRNGKey(0)
    kx, kp = jax.random.split(key)

    batch = 2
    num_obs = 4        # e.g. CartPole observation dim
    num_actions = 8    # small action space
    hidden = HIDDEN    # as in the PyTorch module

    x = jax.random.normal(kx, (batch, num_obs), dtype=jnp.float32)
    w1, b1, w2, b2 = init_params(kp, num_obs, num_actions, hidden)

    out = jax.block_until_ready(dqn_forward(x, w1, b1, w2, b2))
    ref = _reference(x, w1, b1, w2, b2)
    assert out.shape == (batch, num_actions)
    # Layer 2 runs in bf16 (f32 accumulation) -> loosened tolerance vs. the f32 reference.
    assert jnp.allclose(out, ref, atol=5e-2, rtol=5e-2)

    # Replay-buffer-sized batch: exercises the multi-tile (grid >= 2, "parallel") path.
    xb = jax.random.normal(kx, (1024, num_obs), dtype=jnp.float32)
    outb = jax.block_until_ready(dqn_forward(xb, w1, b1, w2, b2))
    refb = _reference(xb, w1, b1, w2, b2)
    assert outb.shape == (1024, num_actions)
    assert jnp.allclose(outb, refb, atol=5e-2, rtol=5e-2)

    # Awkward batch size: exercises adaptive tiling (even grid, small padding waste).
    xc = jax.random.normal(kx, (4100, num_obs), dtype=jnp.float32)
    outc = jax.block_until_ready(dqn_forward(xc, w1, b1, w2, b2))
    refc = _reference(xc, w1, b1, w2, b2)
    assert outc.shape == (4100, num_actions)
    assert jnp.allclose(outc, refc, atol=5e-2, rtol=5e-2)

    print("KERNEL_OK")
</pallas_src>

<mosaic_0001>
module attributes {stable_mosaic.version = 11 : i64} {
  func.func @_dqn_kernel(%arg0: i32, %arg1: memref<8x8xf32, #tpu.memory_space<vmem>>, %arg2: memref<8x128xf32, #tpu.memory_space<vmem>>, %arg3: memref<1x128xf32, #tpu.memory_space<vmem>>, %arg4: memref<128x8xbf16, #tpu.memory_space<vmem>>, %arg5: memref<1x8xf32, #tpu.memory_space<vmem>>, %arg6: memref<8x8xf32, #tpu.memory_space<vmem>>) attributes {dimension_semantics = [#tpu.dimension_semantics<parallel>], iteration_bounds = array<i64: 1>, scalar_prefetch = 0 : i64, scratch_operands = 0 : i64, tpu.core_type = #tpu.core_type<tc>, window_params = [{transform_indices = @transform_0, window_bounds = array<i64: 8, 8>}, {pipeline_mode = #tpu.pipeline_mode<synchronous>, transform_indices = @transform_1, window_bounds = array<i64: 8, 128>}, {pipeline_mode = #tpu.pipeline_mode<synchronous>, transform_indices = @transform_2, window_bounds = array<i64: 1, 128>}, {pipeline_mode = #tpu.pipeline_mode<synchronous>, transform_indices = @transform_3, window_bounds = array<i64: 128, 8>}, {pipeline_mode = #tpu.pipeline_mode<synchronous>, transform_indices = @transform_4, window_bounds = array<i64: 1, 8>}, {transform_indices = @transform_5, window_bounds = array<i64: 8, 8>}]} {
    %c0 = arith.constant 0 : index
    %c0_0 = arith.constant 0 : index
    %0 = vector.load %arg1[%c0, %c0_0] : memref<8x8xf32, #tpu.memory_space<vmem>>, vector<8x8xf32>
    %c0_1 = arith.constant 0 : index
    %c0_2 = arith.constant 0 : index
    %1 = vector.load %arg2[%c0_1, %c0_2] : memref<8x128xf32, #tpu.memory_space<vmem>>, vector<8x128xf32>
    %cst = arith.constant dense<0.000000e+00> : vector<8x128xf32>
    %2 = tpu.matmul %0, %1, %cst {dimension_numbers = #tpu.dot_dimension_numbers<[1], [0], [0], [1], [0, 0, 1, 1], [], []>} : vector<8x8xf32>, vector<8x128xf32>, vector<8x128xf32> -> vector<8x128xf32>
    %c0_3 = arith.constant 0 : index
    %c0_4 = arith.constant 0 : index
    %3 = vector.load %arg3[%c0_3, %c0_4] : memref<1x128xf32, #tpu.memory_space<vmem>>, vector<1x128xf32>
    %4 = vector.broadcast %3 : vector<1x128xf32> to vector<8x128xf32>
    %5 = arith.addf %2, %4 : vector<8x128xf32>
    %cst_5 = arith.constant 0.000000e+00 : f32
    %6 = vector.broadcast %cst_5 : f32 to vector<8x128xf32>
    %7 = arith.maximumf %5, %6 : vector<8x128xf32>
    %8 = arith.truncf %7 : vector<8x128xf32> to vector<8x128xbf16>
    %c0_6 = arith.constant 0 : index
    %c0_7 = arith.constant 0 : index
    %9 = vector.load %arg4[%c0_6, %c0_7] : memref<128x8xbf16, #tpu.memory_space<vmem>>, vector<128x8xbf16>
    %cst_8 = arith.constant dense<0.000000e+00> : vector<8x8xf32>
    %10 = tpu.matmul %8, %9, %cst_8 {dimension_numbers = #tpu.dot_dimension_numbers<[1], [0], [0], [1], [0, 0, 1, 1], [], []>} : vector<8x128xbf16>, vector<128x8xbf16>, vector<8x8xf32> -> vector<8x8xf32>
    %c0_9 = arith.constant 0 : index
    %c0_10 = arith.constant 0 : index
    %11 = vector.load %arg5[%c0_9, %c0_10] : memref<1x8xf32, #tpu.memory_space<vmem>>, vector<1x8xf32>
    %12 = vector.broadcast %11 : vector<1x8xf32> to vector<8x8xf32>
    %13 = arith.addf %10, %12 : vector<8x8xf32>
    %c0_11 = arith.constant 0 : index
    %c0_12 = arith.constant 0 : index
    %14 = vector.load %arg6[%c0_11, %c0_12] : memref<8x8xf32, #tpu.memory_space<vmem>>, vector<8x8xf32>
    tpu.vector_store %arg6[%c0_11, %c0_12], %13 {strides = array<i32>} : memref<8x8xf32, #tpu.memory_space<vmem>>, vector<8x8xf32>,
    return
  }
  func.func @transform_0(%arg0: i32) -> (i32, i32) {
    %c0_i32 = arith.constant 0 : i32
    %c0_i32_0 = arith.constant 0 : i32
    return %arg0, %c0_i32 : i32, i32
  }
  func.func @transform_1(%arg0: i32) -> (i32, i32) {
    %c0_i32 = arith.constant 0 : i32
    %c0_i32_0 = arith.constant 0 : i32
    %c0_i32_1 = arith.constant 0 : i32
    return %c0_i32, %c0_i32_0 : i32, i32
  }
  func.func @transform_2(%arg0: i32) -> (i32, i32) {
    %c0_i32 = arith.constant 0 : i32
    %c0_i32_0 = arith.constant 0 : i32
    %c0_i32_1 = arith.constant 0 : i32
    return %c0_i32, %c0_i32_0 : i32, i32
  }
  func.func @transform_3(%arg0: i32) -> (i32, i32) {
    %c0_i32 = arith.constant 0 : i32
    %c0_i32_0 = arith.constant 0 : i32
    %c0_i32_1 = arith.constant 0 : i32
    return %c0_i32, %c0_i32_0 : i32, i32
  }
  func.func @transform_4(%arg0: i32) -> (i32, i32) {
    %c0_i32 = arith.constant 0 : i32
    %c0_i32_0 = arith.constant 0 : i32
    %c0_i32_1 = arith.constant 0 : i32
    return %c0_i32, %c0_i32_0 : i32, i32
  }
  func.func @transform_5(%arg0: i32) -> (i32, i32) {
    %c0_i32 = arith.constant 0 : i32
    %c0_i32_0 = arith.constant 0 : i32
    return %arg0, %c0_i32 : i32, i32
  }
}

</mosaic_0001>

<llo_original>
// kernel: dqn_forward.1
$region0: #{dqn_forward.1}
  #allocation0 [shape = 'u32[]', space=smem, size = 0x4, offset = 0x4, fixed_abs, tag = 'smem constant byte address 0x4 - core index']
  #allocation1 [shape = 'u32[144,128]{1,0:T(1,128)}', space=vmem, size = 0x12000, scoped, tag = 'internal scratch']
  %s0 = inlined_call_operand.vmem [shape: f32[8,8], index: 0, kind: input, shape index: {}]
  %s1 = inlined_call_operand.vmem [shape: f32[8,128], index: 1, kind: input, shape index: {}]
  %s2 = inlined_call_operand.vmem [shape: f32[1,128], index: 2, kind: input, shape index: {}]
  %s3 = inlined_call_operand.vmem [shape: bf16[128,8], index: 3, kind: input, shape index: {}]
  %s4 = inlined_call_operand.vmem [shape: f32[1,8], index: 4, kind: input, shape index: {}]
  %s5 = inlined_call_operand.vmem [shape: f32[8,8], index: 5, kind: output, shape index: {}]
  %s6 = sld [smem:[#allocation0]]
  $region30: #{dqn_forward.1} parent=0
    _
  %s8 = ssub.s32 1, %s6
  %s9 = scalar_select 0, %s8, %s6
  // Predicated region
  $region2: #{dqn_forward.1} parent=0 // pred_check
    _
  $region3: #{dqn_forward.1} parent=0 // pred_check_branch
    %11 = sbr.rel (0) target = $region5
  $region4: #{dqn_forward.1} parent=0 // pred_region
    _
  $region5: #{dqn_forward.1} parent=0 // pred_fallthru
    _
  // Predicated region
  $region6: #{dqn_forward.1} parent=0 // pred_check
    _
  $region7: #{dqn_forward.1} parent=0 // pred_check_branch
    %13 = sbr.rel (0) target = $region9
  $region8: #{dqn_forward.1} parent=0 // pred_region
    _
  $region9: #{dqn_forward.1} parent=0 // pred_fallthru
    _
  // Predicated region
  $region10: #{dqn_forward.1} parent=0 // pred_check
    _
  $region11: #{dqn_forward.1} parent=0 // pred_check_branch
    %15 = sbr.rel (0) target = $region13
  $region12: #{dqn_forward.1} parent=0 // pred_region
    _
  $region13: #{dqn_forward.1} parent=0 // pred_fallthru
    _
  // Predicated region
  $region14: #{dqn_forward.1} parent=0 // pred_check
    _
  $region15: #{dqn_forward.1} parent=0 // pred_check_branch
    %17 = sbr.rel (0) target = $region17
  $region16: #{dqn_forward.1} parent=0 // pred_region
    _
  $region17: #{dqn_forward.1} parent=0 // pred_fallthru
    _
  // Predicated region
  $region18: #{dqn_forward.1} parent=0 // pred_check
    _
  $region19: #{dqn_forward.1} parent=0 // pred_check_branch
    %19 = sbr.rel (0) target = $region21
  $region20: #{dqn_forward.1} parent=0 // pred_region
    _
  $region21: #{dqn_forward.1} parent=0 // pred_fallthru
    _
  %v21 = vld [vmem:[%s0] sm:$0xff]
  %v22 = vld [vmem:[%s1] sm:$0xff]
  %v23 = vld [vmem:[%s2] sm:$0x1]
  %v25 = vlaneseq
  %v26 = vshrl.u32 %v25, 7
  %v27 = vsub.s32 0, %v26
  %v28 = vrot.slane %v23, %v27
  %vm30 = vcmask 64512
  %v32 = vsel %vm30, %v21, 0
  %34 = vmatprep.subr.mxu0 0.0
  %35 = vmatpush1.msra.mxu0 0.0
  %36 = vmatprep.subr.mxu0 0.0
  %37 = vmatpush1.msra.mxu0 0.0
  %38 = vmatprep.subr.mxu0 0.0
  %39 = vmatpush1.msra.mxu0 0.0
  %40 = vmatprep.subr.mxu0 0.0
  %41 = vmatpush1.msra.mxu0 0.0
  %42 = vmatprep.subr.mxu0 0.0
  %43 = vmatpush1.msra.mxu0 0.0
  %44 = vmatprep.subr.mxu0 0.0
  %45 = vmatpush1.msra.mxu0 0.0
  %46 = vmatprep.subr.mxu0 0.0
  %47 = vmatpush1.msra.mxu0 0.0
  %48 = vmatprep.subr.mxu0 0.0
  %49 = vmatpush1.msra.mxu0 0.0
  %50 = vmatprep.subr.mxu0 0.0
  %51 = vmatpush1.msra.mxu0 0.0
  %52 = vmatprep.subr.mxu0 0.0
  %53 = vmatpush1.msra.mxu0 0.0
  %54 = vmatprep.subr.mxu0 0.0
  %55 = vmatpush1.msra.mxu0 0.0
  %56 = vmatprep.subr.mxu0 0.0
  %57 = vmatpush1.msra.mxu0 0.0
  %58 = vmatprep.subr.mxu0 0.0
  %59 = vmatpush1.msra.mxu0 0.0
  %60 = vmatprep.subr.mxu0 0.0
  %61 = vmatpush1.msra.mxu0 0.0
  %62 = vmatprep.subr.mxu0 0.0
  %63 = vmatpush1.msra.mxu0 0.0
  %64 = vmatprep.subr.mxu0 0.0
  %65 = vmatpush1.msra.mxu0 %v22
  %66 = vmatprep.subr.mxu0 0.0
  %67 = vmatpush2.msra.mxu0 0.0
  %68 = vmatprep.subr.mxu0 0.0
  %69 = vmatpush2.msra.mxu0 0.0
  %70 = vmatprep.subr.mxu0 0.0
  %71 = vmatpush2.msra.mxu0 0.0
  %72 = vmatprep.subr.mxu0 0.0
  %73 = vmatpush2.msra.mxu0 0.0
  %74 = vmatprep.subr.mxu0 0.0
  %75 = vmatpush2.msra.mxu0 0.0
  %76 = vmatprep.subr.mxu0 0.0
  %77 = vmatpush2.msra.mxu0 0.0
  %78 = vmatprep.subr.mxu0 0.0
  %79 = vmatpush2.msra.mxu0 0.0
  %80 = vmatprep.subr.mxu0 0.0
  %81 = vmatpush2.msra.mxu0 0.0
  %82 = vmatprep.subr.mxu0 0.0
  %83 = vmatpush2.msra.mxu0 0.0
  %84 = vmatprep.subr.mxu0 0.0
  %85 = vmatpush2.msra.mxu0 0.0
  %86 = vmatprep.subr.mxu0 0.0
  %87 = vmatpush2.msra.mxu0 0.0
  %88 = vmatprep.subr.mxu0 0.0
  %89 = vmatpush2.msra.mxu0 0.0
  %90 = vmatprep.subr.mxu0 0.0
  %91 = vmatpush2.msra.mxu0 0.0
  %92 = vmatprep.subr.mxu0 0.0
  %93 = vmatpush2.msra.mxu0 0.0
  %94 = vmatprep.subr.mxu0 0.0
  %95 = vmatpush2.msra.mxu0 0.0
  %96 = vmatprep.subr.mxu0 0.0
  %97 = vmatpush2.msra.mxu0 0.0
  %98 = vmatprep.mubr.f32.mxu0 0.0
  %99 = vmatmul.mubr.f32.gmra.mxu0 %v32
  %v100 = vpop.f32.mrf.mxu0
  %v101 = vadd.f32 %v28, %v100
  %v102 = vpop.f32.mrf.mxu0
  %103 = vdwg.mxu0
  %v104 = vmax.f32 %v101, 0.0
  %v105 = vpack.c.bf16 %v104, %v104
  %v106 = vld [vmem:[%s3] sm:$0xf]
  %v107 = vld [vmem:[%s3 + $0x4] sm:$0xf]
  %v108 = vld [vmem:[%s3 + $0x8] sm:$0xf]
  %v109 = vld [vmem:[%s3 + $0xc] sm:$0xf]
  %v110 = vld [vmem:[%s3 + $0x10] sm:$0xf]
  %v111 = vld [vmem:[%s3 + $0x14] sm:$0xf]
  %v112 = vld [vmem:[%s3 + $0x18] sm:$0xf]
  %v113 = vld [vmem:[%s3 + $0x1c] sm:$0xf]
  %v114 = vld [vmem:[%s3 + $0x20] sm:$0xf]
  %v115 = vld [vmem:[%s3 + $0x24] sm:$0xf]
  %v116 = vld [vmem:[%s3 + $0x28] sm:$0xf]
  %v117 = vld [vmem:[%s3 + $0x2c] sm:$0xf]
  %v118 = vld [vmem:[%s3 + $0x30] sm:$0xf]
  %v119 = vld [vmem:[%s3 + $0x34] sm:$0xf]
  %v120 = vld [vmem:[%s3 + $0x38] sm:$0xf]
  %v121 = vld [vmem:[%s3 + $0x3c] sm:$0xf]
  %v122 = vld [vmem:[%s4] sm:$0x1]
  %v124 = vlaneseq
  %v125 = vshrl.u32 %v124, 7
  %v126 = vsub.s32 0, %v125
  %v127 = vrot.slane %v122, %v126
  %v145 = vunpack.c.l.b16 %v106
  %v146 = vunpack.c.l.b16 %v107
  %v147 = vunpack.c.l.b16 %v108
  %v148 = vunpack.c.l.b16 %v109
  %v149 = vunpack.c.l.b16 %v110
  %v150 = vunpack.c.l.b16 %v111
  %v151 = vunpack.c.l.b16 %v112
  %v152 = vunpack.c.l.b16 %v113
  %v153 = vunpack.c.l.b16 %v114
  %v154 = vunpack.c.l.b16 %v115
  %v155 = vunpack.c.l.b16 %v116
  %v156 = vunpack.c.l.b16 %v117
  %v157 = vunpack.c.l.b16 %v118
  %v158 = vunpack.c.l.b16 %v119
  %v159 = vunpack.c.l.b16 %v120
  %v160 = vunpack.c.l.b16 %v121
  %v161 = vpack.c.b16 %v146, %v145
  %v162 = vpack.c.b16 %v148, %v147
  %v163 = vpack.c.b16 %v150, %v149
  %v164 = vpack.c.b16 %v152, %v151
  %v165 = vpack.c.b16 %v154, %v153
  %v166 = vpack.c.b16 %v156, %v155
  %v167 = vpack.c.b16 %v158, %v157
  %v168 = vpack.c.b16 %v160, %v159
  %177 = vmatprep.subr.bf16.mxu0 0
  %178 = vmatpush1.bf16.msra.mxu0 %v168
  %179 = vmatprep.subr.bf16.mxu0 0
  %180 = vmatpush1.bf16.msra.mxu0 %v167
  %181 = vmatprep.subr.bf16.mxu0 0
  %182 = vmatpush1.bf16.msra.mxu0 %v166
  %183 = vmatprep.subr.bf16.mxu0 0
  %184 = vmatpush1.bf16.msra.mxu0 %v165
  %185 = vmatprep.subr.bf16.mxu0 0
  %186 = vmatpush1.bf16.msra.mxu0 %v164
  %187 = vmatprep.subr.bf16.mxu0 0
  %188 = vmatpush1.bf16.msra.mxu0 %v163
  %189 = vmatprep.subr.bf16.mxu0 0
  %190 = vmatpush1.bf16.msra.mxu0 %v162
  %191 = vmatprep.subr.bf16.mxu0 0
  %192 = vmatpush1.bf16.msra.mxu0 %v161
  %193 = vmatprep.subr.bf16.mxu0 0
  %194 = vmatpush2.bf16.msra.mxu0 0
  %195 = vmatprep.subr.bf16.mxu0 0
  %196 = vmatpush2.bf16.msra.mxu0 0
  %197 = vmatprep.subr.bf16.mxu0 0
  %198 = vmatpush2.bf16.msra.mxu0 0
  %199 = vmatprep.subr.bf16.mxu0 0
  %200 = vmatpush2.bf16.msra.mxu0 0
  %201 = vmatprep.subr.bf16.mxu0 0
  %202 = vmatpush2.bf16.msra.mxu0 0
  %203 = vmatprep.subr.bf16.mxu0 0
  %204 = vmatpush2.bf16.msra.mxu0 0
  %205 = vmatprep.subr.bf16.mxu0 0
  %206 = vmatpush2.bf16.msra.mxu0 0
  %207 = vmatprep.subr.bf16.mxu0 0
  %208 = vmatpush2.bf16.msra.mxu0 0
  %209 = vmatprep.mubr.bf16.mxu0 0
  %210 = vmatmul.mubr.bf16.gmra.mxu0 %v105
  %v211 = vpop.f32.mrf.mxu0
  %v212 = vadd.f32 %v127, %v211
  %v213 = vpop.f32.mrf.mxu0
  %v214 = vpop.f32.mrf.mxu0
  %v215 = vpop.f32.mrf.mxu0
  %216 = vdwg.mxu0
  %217 = vst.msk [vmem:[%s5] sm:$0xff] %vm30, %v212
  // Predicated region
  $region22: #{dqn_forward.1} parent=0 // pred_check
    _
  $region23: #{dqn_forward.1} parent=0 // pred_check_branch
    %219 = sbr.rel (0) target = $region25
  $region24: #{dqn_forward.1} parent=0 // pred_region
    _
  $region25: #{dqn_forward.1} parent=0 // pred_fallthru
    _
  // Predicated region
  $region26: #{dqn_forward.1} parent=0 // pred_check
    _
  $region27: #{dqn_forward.1} parent=0 // pred_check_branch
    %221 = sbr.rel (0) target = $region29
  $region28: #{dqn_forward.1} parent=0 // pred_region
    _
  $region29: #{dqn_forward.1} parent=0 // pred_fallthru
    _

</llo_original>
